<compile_context>
chip_gen: v7x
topology: tpu7x:2x2x1
jax: 0.10.0
libtpu: 0.0.40
codegen_flags: <defaults>
</compile_context>

<pallas_src>
import jax
import jax.numpy as jnp
from jax.experimental import pallas as pl
from jax.experimental.pallas import tpu as pltpu

LN10 = 2.302585092994046
LANES = 128

# Deterministic "dataset statistics" (module-level globals in the original file).
# Only index 2 is actually used by the loss.
CAT_MEAN = (0.0, 0.0, 9.5, 0.0)
CAT_STD = (1.0, 1.0, 0.25, 1.0)


def custom_loss_expz_ref(preds, targets, target_err):
    """Pure-JAX reference mirroring the PyTorch module exactly."""
    std2 = CAT_STD[2]
    mean2 = CAT_MEAN[2]
    preds_t = preds.at[:, 2].set(10.0 ** (preds[:, 2] * std2 + mean2))
    targets_t = targets.at[:, 2].set(10.0 ** (targets[:, 2] * std2 + mean2))
    err_t = target_err.at[:, 2].multiply(std2)  # overwritten next line (as in torch code)
    err_t = err_t.at[:, 2].set(jnp.abs(target_err[:, 2] * LN10 * targets_t[:, 2]))
    return jnp.mean((preds_t - targets_t) ** 2 / err_t)


def _make_loss_kernel(n_cols, tile_rows, inner_steps):
    """Tiled reduction kernel over the lane-dense (rows, 128) slab."""
    exp_a = LN10 * CAT_STD[2]   # 10**(x*std+mean) == exp(x*exp_a + exp_b)
    exp_b = LN10 * CAT_MEAN[2]

    def loss_kernel(preds_ref, targets_ref, err_ref, out_ref, acc_ref):
        i = pl.program_id(1)  # reduction step within this partial sum

        @pl.when(i == 0)
        def _init():
            acc_ref[...] = jnp.zeros_like(acc_ref)

        preds = preds_ref[...]
        targets = targets_ref[...]
        err = err_ref[...]

        # Original column index of each element of the flattened slab.  When
        # 128 % C == 0 the mask depends only on the lane, so it is grid-invariant
        # (the compiler hoists the iota/cmp constants out of the grid loop).
        lane = jax.lax.broadcasted_iota(jnp.int32, preds.shape, 1)
        if LANES % n_cols == 0:
            is_col2 = (lane % n_cols) == 2
        else:
            row = jax.lax.broadcasted_iota(jnp.int32, preds.shape, 0)
            g_row = (pl.program_id(0) * inner_steps + i) * tile_rows + row
            is_col2 = ((g_row * LANES + lane) % n_cols) == 2

        # Forward-only selects: the discarded exp branch may overflow (inf/nan)
        # for non-col-2 lanes; jnp.where never propagates the discarded value.
        preds_exp = jnp.exp(preds * exp_a + exp_b)
        targets_exp = jnp.exp(targets * exp_a + exp_b)

        diff = jnp.where(is_col2, preds_exp - targets_exp, preds - targets)
        # err column 2: |err * ln(10) * targets_t_col2|; other columns untouched.
        err_t = jnp.where(is_col2, jnp.abs(err * LN10 * targets_exp), err)

        # Approx reciprocal: EUP push + VPU mul instead of a refined divide.
        term = diff * diff * pl.reciprocal(err_t, approx=True)

        # Vector accumulator: per-step work is pure VPU adds of vregs; the
        # cross-lane/sublane reduce and the output store happen once, below.
        acc_ref[...] += jnp.sum(term.reshape(-1, 8, LANES), axis=0)

        @pl.when(i == inner_steps - 1)
        def _finalize():
            # Full (8,128) tile -> unmasked lane-dense store of the partial sum.
            out_ref[...] = jnp.full(out_ref.shape, jnp.sum(acc_ref[...]),
                                    dtype=out_ref.dtype)

    return loss_kernel


def _num_partial_sums_default():
    """2 on chips with two schedulable TensorCores (v4/v5p megacore, v7x), else 1."""
    try:
        kind = jax.devices()[0].device_kind.lower()
    except Exception:
        return 1
    return 2 if ("v7" in kind or "v5p" in kind or "v4" in kind) else 1


def _tail_loss_sum(preds_f, targets_f, err_f, start, n_cols):
    """Pure-JAX sum of loss terms for the flat row-major tail [start:count)."""
    col = (jnp.arange(preds_f.shape[0], dtype=jnp.int32) + start) % n_cols
    is2 = col == 2
    a = LN10 * CAT_STD[2]
    b = LN10 * CAT_MEAN[2]
    pe = jnp.exp(preds_f * a + b)
    te = jnp.exp(targets_f * a + b)
    diff = jnp.where(is2, pe - te, preds_f - targets_f)
    err_t = jnp.where(is2, jnp.abs(err_f * LN10 * te), err_f)
    return jnp.sum(diff * diff / err_t)


def custom_loss_expz(preds, targets, target_err, *, tile_rows=2048,
                     num_partials=None, min_pallas_elems=262144):
    """Pallas TPU implementation of CustomLossExpz.forward -> scalar loss."""
    preds = jnp.asarray(preds, jnp.float32)
    targets = jnp.asarray(targets, jnp.float32)
    target_err = jnp.asarray(target_err, jnp.float32)

    n, c = preds.shape
    count = n * c
    rows = count // LANES            # complete 128-lane rows (no padding needed)

    # Tiny problems: pallas_call dispatch + DMA latency dominates; fused XLA wins.
    if count < min_pallas_elems or rows < 8:
        return custom_loss_expz_ref(preds, targets, target_err)

    if num_partials is None:
        num_partials = _num_partial_sums_default()
    num_partials = int(max(1, num_partials))
    if rows < 8 * num_partials:
        num_partials = 1

    # Choose num_partials first (full-extent 'parallel' axis on 2-TC chips), then
    # the largest tile that keeps 3 inputs x 2 pipeline buffers <= 12 MiB (safe
    # under v5e's 16 MiB scoped-VMEM default) and needs no padding; then re-fit
    # the tile to the chosen grid so the pure-JAX tail stays small.
    tile_cap = int(min(max(8, (tile_rows // 8) * 8), 4096))
    tr = min(tile_cap, 8 * (rows // (num_partials * 8)))
    inner_steps = max(1, rows // (num_partials * tr))
    tr = min(tile_cap, 8 * (rows // (num_partials * inner_steps * 8)))
    main_rows = num_partials * inner_steps * tr
    main_count = main_rows * LANES

    flat_p = preds.reshape(-1)       # free bitcasts of row-major contiguous inputs
    flat_t = targets.reshape(-1)
    flat_e = target_err.reshape(-1)

    if count % LANES == 0:
        # Zero-copy: (rows,128) slab is a pure reshape; the grid only touches the
        # first main_rows rows, the remainder goes through the pure-JAX tail.
        p_slab = flat_p.reshape(rows, LANES)
        t_slab = flat_t.reshape(rows, LANES)
        e_slab = flat_e.reshape(rows, LANES)
    else:
        # N*C not a multiple of 128: one prefix-slice copy per input for the
        # lane-dense slab.  TODO(synk): zero-copy path via manual DMA for this case.
        p_slab = flat_p[:main_count].reshape(main_rows, LANES)
        t_slab = flat_t[:main_count].reshape(main_rows, LANES)
        e_slab = flat_e[:main_count].reshape(main_rows, LANES)

    kernel = _make_loss_kernel(c, tr, inner_steps)
    in_spec = pl.BlockSpec((tr, LANES), lambda p, i: (p * inner_steps + i, 0))

    partials = pl.pallas_call(
        kernel,
        out_shape=jax.ShapeDtypeStruct((num_partials, 8, LANES), jnp.float32),
        grid_spec=pltpu.PrefetchScalarGridSpec(
            num_scalar_prefetch=0,
            grid=(num_partials, inner_steps),
            in_specs=[in_spec, in_spec, in_spec],
            out_specs=pl.BlockSpec((1, 8, LANES), lambda p, i: (p, 0, 0)),
            scratch_shapes=[pltpu.VMEM((8, LANES), jnp.float32)],
        ),
        compiler_params=pltpu.CompilerParams(
            dimension_semantics=("parallel", "arbitrary"),
        ),
        cost_estimate=pl.CostEstimate(
            flops=8 * main_count,
            transcendentals=3 * main_count,
            bytes_accessed=3 * main_count * 4 + num_partials * 8 * LANES * 4,
        ),
    )(p_slab, t_slab, e_slab)

    total = jnp.sum(partials[:, 0, 0])
    if main_count < count:
        total = total + _tail_loss_sum(flat_p[main_count:], flat_t[main_count:],
                                       flat_e[main_count:], main_count, c)
    return total / count


if __name__ == "__main__":
    key = jax.random.PRNGKey(0)
    k1, k2, k3 = jax.random.split(key, 3)

    # 4 predicted host properties per object; N chosen so N*C is a multiple of
    # 128 (zero-copy lane-dense slab).  min_pallas_elems is overridden below to
    # force the Pallas path at these small demo shapes.
    N, C = 4096, 4
    preds = jax.random.normal(k1, (N, C), dtype=jnp.float32)
    targets = jax.random.normal(k2, (N, C), dtype=jnp.float32)
    # keep errors strictly positive so the division is well-behaved
    target_err = jax.random.uniform(k3, (N, C), dtype=jnp.float32,
                                    minval=0.1, maxval=1.0)

    ref = custom_loss_expz_ref(preds, targets, target_err)
    # Tolerance covers f32 accumulation-order differences and the approx reciprocal.
    TOL = 2e-3

    # 1) Zero-copy path, single partial, single reduction step.
    loss = jax.block_until_ready(
        custom_loss_expz(preds, targets, target_err,
                         num_partials=1, min_pallas_elems=1024))
    assert jnp.allclose(loss, ref, rtol=TOL), (loss, ref)

    # 2) Two partial sums (v7x-style full-extent 'parallel' axis) + multi-step reduction.
    loss2 = jax.block_until_ready(
        custom_loss_expz(preds, targets, target_err,
                         tile_rows=32, num_partials=2, min_pallas_elems=1024))
    assert jnp.allclose(loss2, ref, rtol=TOL), (loss2, ref)

    # 3) N*C not a multiple of 128 -> prefix slab + pure-JAX tail term.
    p3, t3, e3 = preds[:1000], targets[:1000], target_err[:1000]
    ref3 = custom_loss_expz_ref(p3, t3, e3)
    loss3 = jax.block_until_ready(
        custom_loss_expz(p3, t3, e3, min_pallas_elems=1024))
    assert jnp.allclose(loss3, ref3, rtol=TOL), (loss3, ref3)

    # 4) Column count that does not divide 128 (exercises the global-row mask path).
    kc1, kc2, kc3 = jax.random.split(jax.random.PRNGKey(1), 3)
    pc = jax.random.normal(kc1, (1024, 3), dtype=jnp.float32)
    tc = jax.random.normal(kc2, (1024, 3), dtype=jnp.float32)
    ec = jax.random.uniform(kc3, (1024, 3), dtype=jnp.float32, minval=0.1, maxval=1.0)
    refc = custom_loss_expz_ref(pc, tc, ec)
    lossc = jax.block_until_ready(
        custom_loss_expz(pc, tc, ec, min_pallas_elems=1024))
    assert jnp.allclose(lossc, refc, rtol=TOL), (lossc, refc)

    # 5) Tiny batch takes the fused pure-JAX fallback path (default threshold).
    p8, t8, e8 = preds[:8], targets[:8], target_err[:8]
    loss_small = jax.block_until_ready(custom_loss_expz(p8, t8, e8))
    ref_small = custom_loss_expz_ref(p8, t8, e8)
    assert jnp.allclose(loss_small, ref_small, rtol=1e-5, atol=1e-5)

    print("KERNEL_OK")
</pallas_src>

<mosaic_0001>
module attributes {stable_mosaic.version = 11 : i64} {
  func.func @loss_kernel(%arg0: i32, %arg1: i32, %arg2: memref<128x128xf32, #tpu.memory_space<vmem>>, %arg3: memref<128x128xf32, #tpu.memory_space<vmem>>, %arg4: memref<128x128xf32, #tpu.memory_space<vmem>>, %arg5: memref<1x8x128xf32, #tpu.memory_space<vmem>>, %arg6: memref<8x128xf32, #tpu.memory_space<vmem>>) attributes {dimension_semantics = [#tpu.dimension_semantics<parallel>, #tpu.dimension_semantics<arbitrary>], iteration_bounds = array<i64: 1, 1>, scalar_prefetch = 0 : i64, scratch_operands = 1 : i64, tpu.core_type = #tpu.core_type<tc>, window_params = [{transform_indices = @transform_0, window_bounds = array<i64: 128, 128>}, {transform_indices = @transform_1, window_bounds = array<i64: 128, 128>}, {transform_indices = @transform_2, window_bounds = array<i64: 128, 128>}, {transform_indices = @transform_3, window_bounds = array<i64: 1, 8, 128>}]} {
    %c0_i32 = arith.constant 0 : i32
    %0 = arith.cmpi eq, %arg1, %c0_i32 : i32
    %1 = arith.extui %0 : i1 to i32
    %c0_i32_0 = arith.constant 0 : i32
    %2 = arith.cmpi ne, %1, %c0_i32_0 : i32
    scf.if %2 {
      %cst_21 = arith.constant 0.000000e+00 : f32
      %54 = vector.broadcast %cst_21 : f32 to vector<8x128xf32>
      %c0_22 = arith.constant 0 : index
      %c0_23 = arith.constant 0 : index
      %55 = vector.load %arg6[%c0_22, %c0_23] : memref<8x128xf32, #tpu.memory_space<vmem>>, vector<8x128xf32>
      tpu.vector_store %arg6[%c0_22, %c0_23], %54 {strides = array<i32>} : memref<8x128xf32, #tpu.memory_space<vmem>>, vector<8x128xf32>,
    } else {
    }
    %c0 = arith.constant 0 : index
    %c0_1 = arith.constant 0 : index
    %3 = vector.load %arg2[%c0, %c0_1] : memref<128x128xf32, #tpu.memory_space<vmem>>, vector<128x128xf32>
    %c0_2 = arith.constant 0 : index
    %c0_3 = arith.constant 0 : index
    %4 = vector.load %arg3[%c0_2, %c0_3] : memref<128x128xf32, #tpu.memory_space<vmem>>, vector<128x128xf32>
    %c0_4 = arith.constant 0 : index
    %c0_5 = arith.constant 0 : index
    %5 = vector.load %arg4[%c0_4, %c0_5] : memref<128x128xf32, #tpu.memory_space<vmem>>, vector<128x128xf32>
    %6 = tpu.iota {dimensions = array<i32: 1>} : vector<128x128xi32>
    %c4_i32 = arith.constant 4 : i32
    %c0_i32_6 = arith.constant 0 : i32
    %7 = arith.cmpi eq, %c4_i32, %c0_i32_6 : i32
    %c1_i32 = arith.constant 1 : i32
    %8 = arith.select %7, %c1_i32, %c4_i32 : i32
    %9 = vector.broadcast %8 : i32 to vector<128x128xi32>
    %10 = arith.remsi %6, %9 : vector<128x128xi32>
    %c0_i32_7 = arith.constant 0 : i32
    %11 = vector.broadcast %c0_i32_7 : i32 to vector<128x128xi32>
    %12 = arith.cmpi ne, %10, %11 : vector<128x128xi32>
    %c0_i32_8 = arith.constant 0 : i32
    %13 = vector.broadcast %c0_i32_8 : i32 to vector<128x128xi32>
    %14 = arith.cmpi slt, %10, %13 : vector<128x128xi32>
    %c0_i32_9 = arith.constant 0 : i32
    %15 = arith.cmpi slt, %8, %c0_i32_9 : i32
    %16 = vector.broadcast %15 : i1 to vector<128x128xi1>
    %17 = vector.broadcast %16 : vector<128x128xi1> to vector<128x128xi1>
    %18 = arith.xori %14, %17 : vector<128x128xi1>
    %19 = arith.andi %18, %12 : vector<128x128xi1>
    %20 = vector.broadcast %8 : i32 to vector<128x128xi32>
    %21 = arith.addi %10, %20 : vector<128x128xi32>
    %22 = arith.select %19, %21, %10 : vector<128x128xi1>, vector<128x128xi32>
    %c2_i32 = arith.constant 2 : i32
    %23 = vector.broadcast %c2_i32 : i32 to vector<128x128xi32>
    %24 = arith.cmpi eq, %22, %23 : vector<128x128xi32>
    %cst = arith.constant 0.575646281 : f32
    %25 = vector.broadcast %cst : f32 to vector<128x128xf32>
    %26 = arith.mulf %3, %25 : vector<128x128xf32>
    %cst_10 = arith.constant 21.8745575 : f32
    %27 = vector.broadcast %cst_10 : f32 to vector<128x128xf32>
    %28 = arith.addf %26, %27 : vector<128x128xf32>
    %29 = math.exp %28 : vector<128x128xf32>
    %cst_11 = arith.constant 0.575646281 : f32
    %30 = vector.broadcast %cst_11 : f32 to vector<128x128xf32>
    %31 = arith.mulf %4, %30 : vector<128x128xf32>
    %cst_12 = arith.constant 21.8745575 : f32
    %32 = vector.broadcast %cst_12 : f32 to vector<128x128xf32>
    %33 = arith.addf %31, %32 : vector<128x128xf32>
    %34 = math.exp %33 : vector<128x128xf32>
    %35 = arith.subf %29, %34 : vector<128x128xf32>
    %36 = arith.subf %3, %4 : vector<128x128xf32>
    %37 = arith.select %24, %35, %36 : vector<128x128xi1>, vector<128x128xf32>
    %cst_13 = arith.constant 2.30258512 : f32
    %38 = vector.broadcast %cst_13 : f32 to vector<128x128xf32>
    %39 = arith.mulf %5, %38 : vector<128x128xf32>
    %40 = arith.mulf %39, %34 : vector<128x128xf32>
    %41 = math.absf %40 : vector<128x128xf32>
    %42 = arith.select %24, %41, %5 : vector<128x128xi1>, vector<128x128xf32>
    %43 = arith.mulf %37, %37 : vector<128x128xf32>
    %44 = tpu.reciprocal %42 {approx = true} : vector<128x128xf32> -> vector<128x128xf32>
    %45 = arith.mulf %43, %44 : vector<128x128xf32>
    %c0_14 = arith.constant 0 : index
    %c0_15 = arith.constant 0 : index
    %46 = vector.load %arg6[%c0_14, %c0_15] : memref<8x128xf32, #tpu.memory_space<vmem>>, vector<8x128xf32>
    %47 = vector.shape_cast %45 : vector<128x128xf32> to vector<16x8x128xf32>
    %cst_16 = arith.constant dense<0.000000e+00> : vector<8x128xf32>
    %48 = vector.multi_reduction <add>, %47, %cst_16 [0] : vector<16x8x128xf32> to vector<8x128xf32>
    %49 = arith.addf %46, %48 : vector<8x128xf32>
    %c0_17 = arith.constant 0 : index
    %c0_18 = arith.constant 0 : index
    %50 = vector.load %arg6[%c0_17, %c0_18] : memref<8x128xf32, #tpu.memory_space<vmem>>, vector<8x128xf32>
    tpu.vector_store %arg6[%c0_17, %c0_18], %49 {strides = array<i32>} : memref<8x128xf32, #tpu.memory_space<vmem>>, vector<8x128xf32>,
    %c0_i32_19 = arith.constant 0 : i32
    %51 = arith.cmpi eq, %arg1, %c0_i32_19 : i32
    %52 = arith.extui %51 : i1 to i32
    %c0_i32_20 = arith.constant 0 : i32
    %53 = arith.cmpi ne, %52, %c0_i32_20 : i32
    scf.if %53 {
      %c0_21 = arith.constant 0 : index
      %c0_22 = arith.constant 0 : index
      %54 = vector.load %arg6[%c0_21, %c0_22] : memref<8x128xf32, #tpu.memory_space<vmem>>, vector<8x128xf32>
      %55 = vector.shape_cast %54 : vector<8x128xf32> to vector<1x8x128xf32>
      %cst_23 = arith.constant dense<0.000000e+00> : vector<1xf32>
      %56 = vector.multi_reduction <add>, %55, %cst_23 [1, 2] : vector<1x8x128xf32> to vector<1xf32>
      %57 = vector.shape_cast %56 : vector<1xf32> to vector<1x1x1xf32>
      %58 = vector.extract %57[0, 0, 0] : f32 from vector<1x1x1xf32>
      %59 = vector.broadcast %58 : f32 to vector<1x8x128xf32>
      %c0_24 = arith.constant 0 : index
      %c0_25 = arith.constant 0 : index
      %c0_26 = arith.constant 0 : index
      %60 = vector.load %arg5[%c0_24, %c0_25, %c0_26] : memref<1x8x128xf32, #tpu.memory_space<vmem>>, vector<1x8x128xf32>
      tpu.vector_store %arg5[%c0_24, %c0_25, %c0_26], %59 {strides = array<i32>} : memref<1x8x128xf32, #tpu.memory_space<vmem>>, vector<1x8x128xf32>,
    } else {
    }
    return
  }
  func.func @transform_0(%arg0: i32, %arg1: i32) -> (i32, i32) {
    %c1_i32 = arith.constant 1 : i32
    %0 = arith.muli %arg0, %c1_i32 : i32
    %1 = arith.addi %0, %arg1 : i32
    %c0_i32 = arith.constant 0 : i32
    %c0_i32_0 = arith.constant 0 : i32
    return %1, %c0_i32 : i32, i32
  }
  func.func @transform_1(%arg0: i32, %arg1: i32) -> (i32, i32) {
    %c1_i32 = arith.constant 1 : i32
    %0 = arith.muli %arg0, %c1_i32 : i32
    %1 = arith.addi %0, %arg1 : i32
    %c0_i32 = arith.constant 0 : i32
    %c0_i32_0 = arith.constant 0 : i32
    return %1, %c0_i32 : i32, i32
  }
  func.func @transform_2(%arg0: i32, %arg1: i32) -> (i32, i32) {
    %c1_i32 = arith.constant 1 : i32
    %0 = arith.muli %arg0, %c1_i32 : i32
    %1 = arith.addi %0, %arg1 : i32
    %c0_i32 = arith.constant 0 : i32
    %c0_i32_0 = arith.constant 0 : i32
    return %1, %c0_i32 : i32, i32
  }
  func.func @transform_3(%arg0: i32, %arg1: i32) -> (i32, i32, i32) {
    %c0_i32 = arith.constant 0 : i32
    %c0_i32_0 = arith.constant 0 : i32
    %c0_i32_1 = arith.constant 0 : i32
    return %arg0, %c0_i32, %c0_i32_0 : i32, i32, i32
  }
}

</mosaic_0001>

<llo_original>
// kernel: tpu_custom_call.1
$region0: #{tpu_custom_call.1}
  #allocation0 [shape = 'u32[]', space=smem, size = 0x4, offset = 0x4, fixed_abs, tag = 'smem constant byte address 0x4 - core index']
  #allocation1 [shape = 'u32[144,128]{1,0:T(1,128)}', space=vmem, size = 0x12000, scoped, tag = 'internal scratch']
  #allocation2 [shape = 'f32[8,128]{1,0:T(8,128)}', space=vmem, size = 0x1000, scoped, tag = 'scratch operand']
  %s0 = inlined_call_operand.hbm [shape: f32[128,128], index: 0, kind: input, shape index: {}]
  %s1 = inlined_call_operand.hbm [shape: f32[128,128], index: 1, kind: input, shape index: {}]
  %s2 = inlined_call_operand.hbm [shape: f32[128,128], index: 2, kind: input, shape index: {}]
  %s3 = inlined_call_operand.hbm [shape: f32[1,8,128], index: 3, kind: output, shape index: {}]
  %s4 = sld [smem:[#allocation0]]
  $region42: #{tpu_custom_call.1} parent=0
    _
  %s6 = ssub.s32 1, %s4
  %s7 = scalar_select 0, %s6, %s4
  $region1: #{tpu_custom_call.1} parent=0
    #allocation3 [shape = 'u8[65536]{0}', space=vmem, size = 0x10000, scoped, tag = 'input window, operand 0, single buffered']
    #allocation4 [shape = 's32[1]{0}', space=sflag, size = 0x4, scoped, tag = 'scoped memory for tpu_custom_call.1']
    #allocation5 [shape = 's32[1]{0}', space=sflag, size = 0x4, scoped, tag = 'scoped memory for tpu_custom_call.1']
    #allocation6 [shape = 'u8[65536]{0}', space=vmem, size = 0x10000, scoped, tag = 'input window, operand 1, single buffered']
    #allocation7 [shape = 's32[1]{0}', space=sflag, size = 0x4, scoped, tag = 'scoped memory for tpu_custom_call.1']
    #allocation8 [shape = 'u8[65536]{0}', space=vmem, size = 0x10000, scoped, tag = 'input window, operand 2, single buffered']
    #allocation9 [shape = 'u8[4096]{0}', space=vmem, size = 0x1000, scoped, tag = 'output window, operand 0, single buffered']
    %8 = vsyncpa [#allocation4], 0
    %9 = vsyncpa [#allocation7], 0
    %10 = vsyncpa [#allocation5], 0
    // Predicated region
    $region2: #{tpu_custom_call.1} parent=1 // pred_check
      _
    $region3: #{tpu_custom_call.1} parent=1 // pred_check_branch
      %12 = sbr.rel (0) target = $region5
    $region4: #{tpu_custom_call.1} parent=1 // pred_region
      %s13 = sadd.s32 0, 0
      %s14 = smul.u32 16, %s13
      %s16 = ssub.s32 2048, 2048
      %17 = vsyncadd [#allocation4], %s16
      %s18 = smul.addr %s14, 128
      %s19 = scalar_lea.hbm %s0, %s18
      %s20 = sshll.u32 [#allocation3], 4
      %s21 = int_to_ptr.vmem [resolvable:$true] %s20
      %26 = dma.hbm_to_vmem [thread:$0]  %s19, 2048, %s21, [#allocation4], 128, 128, 8
    $region5: #{tpu_custom_call.1} parent=1 // pred_fallthru
      _
    // Predicated region
    $region6: #{tpu_custom_call.1} parent=1 // pred_check
      _
    $region7: #{tpu_custom_call.1} parent=1 // pred_check_branch
      %28 = sbr.rel (0) target = $region9
    $region8: #{tpu_custom_call.1} parent=1 // pred_region
      %s29 = sadd.s32 0, 0
      %s30 = smul.u32 16, %s29
      %s32 = ssub.s32 2048, 2048
      %33 = vsyncadd [#allocation7], %s32
      %s34 = smul.addr %s30, 128
      %s35 = scalar_lea.hbm %s1, %s34
      %s36 = sshll.u32 [#allocation6], 4
      %s37 = int_to_ptr.vmem [resolvable:$true] %s36
      %42 = dma.hbm_to_vmem [thread:$0]  %s35, 2048, %s37, [#allocation7], 128, 128, 8
    $region9: #{tpu_custom_call.1} parent=1 // pred_fallthru
      _
    // Predicated region
    $region10: #{tpu_custom_call.1} parent=1 // pred_check
      _
    $region11: #{tpu_custom_call.1} parent=1 // pred_check_branch
      %44 = sbr.rel (0) target = $region13
    $region12: #{tpu_custom_call.1} parent=1 // pred_region
      %s45 = sadd.s32 0, 0
      %s46 = smul.u32 16, %s45
      %s48 = ssub.s32 2048, 2048
      %49 = vsyncadd [#allocation7], %s48
      %s50 = smul.addr %s46, 128
      %s51 = scalar_lea.hbm %s2, %s50
      %s52 = sshll.u32 [#allocation8], 4
      %s53 = int_to_ptr.vmem [resolvable:$true] %s52
      %58 = dma.hbm_to_vmem [thread:$0]  %s51, 2048, %s53, [#allocation7], 128, 128, 8
    $region13: #{tpu_custom_call.1} parent=1 // pred_fallthru
      _
    // Predicated region
    $region14: #{tpu_custom_call.1} parent=1 // pred_check
      _
    $region15: #{tpu_custom_call.1} parent=1 // pred_check_branch
      %60 = sbr.rel (0) target = $region17
    $region16: #{tpu_custom_call.1} parent=1 // pred_region
      %61 = dma.done [#allocation4], 2048
    $region17: #{tpu_custom_call.1} parent=1 // pred_fallthru
      _
    // Predicated region
    $region18: #{tpu_custom_call.1} parent=1 // pred_check
      _
    $region19: #{tpu_custom_call.1} parent=1 // pred_check_branch
      %63 = sbr.rel (0) target = $region21
    $region20: #{tpu_custom_call.1} parent=1 // pred_region
      %64 = dma.done [#allocation7], 2048
    $region21: #{tpu_custom_call.1} parent=1 // pred_fallthru
      _
    // Predicated region
    $region22: #{tpu_custom_call.1} parent=1 // pred_check
      _
    $region23: #{tpu_custom_call.1} parent=1 // pred_check_branch
      %66 = sbr.rel (0) target = $region25
    $region24: #{tpu_custom_call.1} parent=1 // pred_region
      %67 = dma.done [#allocation7], 2048
    $region25: #{tpu_custom_call.1} parent=1 // pred_fallthru
      _
    %s68 = sadd.s32 0, 0
    %s69 = smul.u32 16, %s68
    %s70 = sadd.s32 0, 0
    %s71 = smul.u32 16, %s70
    %s72 = sadd.s32 0, 0
    %s73 = smul.u32 16, %s72
    %p74 = scmp.eq.s32.totalorder 0, 0
    // Predicated region
    $region26: #{tpu_custom_call.1} parent=1 // pred_check
      %p75 = pneg %p74
    $region27: #{tpu_custom_call.1} parent=1 // pred_check_branch
      %77 = sbr.rel (%p75) target = $region29
    $region28: #{tpu_custom_call.1} parent=1 // pred_region
      %78 = vst [vmem:[#allocation2] sm:$0xff] 0.0
    $region29: #{tpu_custom_call.1} parent=1 // pred_fallthru
      _
    %v79 = vld [vmem:[#allocation3] sm:$0xff]
    %v80 = vld [vmem:[#allocation3 + $0x8] sm:$0xff]
    %v81 = vld [vmem:[#allocation3 + $0x10] sm:$0xff]
    %v82 = vld [vmem:[#allocation3 + $0x18] sm:$0xff]
    %v83 = vld [vmem:[#allocation3 + $0x20] sm:$0xff]
    %v84 = vld [vmem:[#allocation3 + $0x28] sm:$0xff]
    %v85 = vld [vmem:[#allocation3 + $0x30] sm:$0xff]
    %v86 = vld [vmem:[#allocation3 + $0x38] sm:$0xff]
    %v87 = vld [vmem:[#allocation3 + $0x40] sm:$0xff]
    %v88 = vld [vmem:[#allocation3 + $0x48] sm:$0xff]
    %v89 = vld [vmem:[#allocation3 + $0x50] sm:$0xff]
    %v90 = vld [vmem:[#allocation3 + $0x58] sm:$0xff]
    %v91 = vld [vmem:[#allocation3 + $0x60] sm:$0xff]
    %v92 = vld [vmem:[#allocation3 + $0x68] sm:$0xff]
    %v93 = vld [vmem:[#allocation3 + $0x70] sm:$0xff]
    %v94 = vld [vmem:[#allocation3 + $0x78] sm:$0xff]
    %v95 = vld [vmem:[#allocation6] sm:$0xff]
    %v96 = vld [vmem:[#allocation6 + $0x8] sm:$0xff]
    %v97 = vld [vmem:[#allocation6 + $0x10] sm:$0xff]
    %v98 = vld [vmem:[#allocation6 + $0x18] sm:$0xff]
    %v99 = vld [vmem:[#allocation6 + $0x20] sm:$0xff]
    %v100 = vld [vmem:[#allocation6 + $0x28] sm:$0xff]
    %v101 = vld [vmem:[#allocation6 + $0x30] sm:$0xff]
    %v102 = vld [vmem:[#allocation6 + $0x38] sm:$0xff]
    %v103 = vld [vmem:[#allocation6 + $0x40] sm:$0xff]
    %v104 = vld [vmem:[#allocation6 + $0x48] sm:$0xff]
    %v105 = vld [vmem:[#allocation6 + $0x50] sm:$0xff]
    %v106 = vld [vmem:[#allocation6 + $0x58] sm:$0xff]
    %v107 = vld [vmem:[#allocation6 + $0x60] sm:$0xff]
    %v108 = vld [vmem:[#allocation6 + $0x68] sm:$0xff]
    %v109 = vld [vmem:[#allocation6 + $0x70] sm:$0xff]
    %v110 = vld [vmem:[#allocation6 + $0x78] sm:$0xff]
    %v111 = vld [vmem:[#allocation8] sm:$0xff]
    %v112 = vld [vmem:[#allocation8 + $0x8] sm:$0xff]
    %v113 = vld [vmem:[#allocation8 + $0x10] sm:$0xff]
    %v114 = vld [vmem:[#allocation8 + $0x18] sm:$0xff]
    %v115 = vld [vmem:[#allocation8 + $0x20] sm:$0xff]
    %v116 = vld [vmem:[#allocation8 + $0x28] sm:$0xff]
    %v117 = vld [vmem:[#allocation8 + $0x30] sm:$0xff]
    %v118 = vld [vmem:[#allocation8 + $0x38] sm:$0xff]
    %v119 = vld [vmem:[#allocation8 + $0x40] sm:$0xff]
    %v120 = vld [vmem:[#allocation8 + $0x48] sm:$0xff]
    %v121 = vld [vmem:[#allocation8 + $0x50] sm:$0xff]
    %v122 = vld [vmem:[#allocation8 + $0x58] sm:$0xff]
    %v123 = vld [vmem:[#allocation8 + $0x60] sm:$0xff]
    %v124 = vld [vmem:[#allocation8 + $0x68] sm:$0xff]
    %v125 = vld [vmem:[#allocation8 + $0x70] sm:$0xff]
    %v126 = vld [vmem:[#allocation8 + $0x78] sm:$0xff]
    %v127 = vlaneseq
    %v128 = vand.u32 %v127, 127
    %vm129 = vcmp.lt.s32.totalorder %v128, 0
    %v130 = vsub.s32 0, %v128
    %v131 = vsel %vm129, %v130, %v128
    %v132 = vshrl.u32 %v131, 2
    %v133 = vand.u32 %v131, 3
    %v134 = vsub.s32 0, %v133
    %v135 = vsel %vm129, %v134, %v133
    %vm136 = vcmp.ne.s32.totalorder %v135, 0
    %vm137 = vcmp.lt.s32.totalorder %v135, 0
    %vm138 = vmand %vm137, %vm136
    %v139 = vadd.s32 %v135, 4
    %v140 = vsel %vm138, %v139, %v135
    %vm141 = vcmp.eq.s32.totalorder %v140, 2
    %v142 = vmul.f32 %v79, 0.5756463
    %v143 = vmul.f32 %v80, 0.5756463
    %v144 = vmul.f32 %v81, 0.5756463
    %v145 = vmul.f32 %v82, 0.5756463
    %v146 = vmul.f32 %v83, 0.5756463
    %v147 = vmul.f32 %v84, 0.5756463
    %v148 = vmul.f32 %v85, 0.5756463
    %v149 = vmul.f32 %v86, 0.5756463
    %v150 = vmul.f32 %v87, 0.5756463
    %v151 = vmul.f32 %v88, 0.5756463
    %v152 = vmul.f32 %v89, 0.5756463
    %v153 = vmul.f32 %v90, 0.5756463
    %v154 = vmul.f32 %v91, 0.5756463
    %v155 = vmul.f32 %v92, 0.5756463
    %v156 = vmul.f32 %v93, 0.5756463
    %v157 = vmul.f32 %v94, 0.5756463
    %v158 = vadd.f32 %v142, 21.874557
    %v159 = vadd.f32 %v143, 21.874557
    %v160 = vadd.f32 %v144, 21.874557
    %v161 = vadd.f32 %v145, 21.874557
    %v162 = vadd.f32 %v146, 21.874557
    %v163 = vadd.f32 %v147, 21.874557
    %v164 = vadd.f32 %v148, 21.874557
    %v165 = vadd.f32 %v149, 21.874557
    %v166 = vadd.f32 %v150, 21.874557
    %v167 = vadd.f32 %v151, 21.874557
    %v168 = vadd.f32 %v152, 21.874557
    %v169 = vadd.f32 %v153, 21.874557
    %v170 = vadd.f32 %v154, 21.874557
    %v171 = vadd.f32 %v155, 21.874557
    %v172 = vadd.f32 %v156, 21.874557
    %v173 = vadd.f32 %v157, 21.874557
    %v174 = vmul.f32 %v158, 1.442695
    %v175 = vpow.pop %v174
    %v176 = vmul.f32 %v159, 1.442695
    %v177 = vpow.pop %v176
    %v178 = vmul.f32 %v160, 1.442695
    %v179 = vpow.pop %v178
    %v180 = vmul.f32 %v161, 1.442695
    %v181 = vpow.pop %v180
    %v182 = vmul.f32 %v162, 1.442695
    %v183 = vpow.pop %v182
    %v184 = vmul.f32 %v163, 1.442695
    %v185 = vpow.pop %v184
    %v186 = vmul.f32 %v164, 1.442695
    %v187 = vpow.pop %v186
    %v188 = vmul.f32 %v165, 1.442695
    %v189 = vpow.pop %v188
    %v190 = vmul.f32 %v166, 1.442695
    %v191 = vpow.pop %v190
    %v192 = vmul.f32 %v167, 1.442695
    %v193 = vpow.pop %v192
    %v194 = vmul.f32 %v168, 1.442695
    %v195 = vpow.pop %v194
    %v196 = vmul.f32 %v169, 1.442695
    %v197 = vpow.pop %v196
    %v198 = vmul.f32 %v170, 1.442695
    %v199 = vpow.pop %v198
    %v200 = vmul.f32 %v171, 1.442695
    %v201 = vpow.pop %v200
    %v202 = vmul.f32 %v172, 1.442695
    %v203 = vpow.pop %v202
    %v204 = vmul.f32 %v173, 1.442695
    %v205 = vpow.pop %v204
    %v206 = vmul.f32 %v95, 0.5756463
    %v207 = vmul.f32 %v96, 0.5756463
    %v208 = vmul.f32 %v97, 0.5756463
    %v209 = vmul.f32 %v98, 0.5756463
    %v210 = vmul.f32 %v99, 0.5756463
    %v211 = vmul.f32 %v100, 0.5756463
    %v212 = vmul.f32 %v101, 0.5756463
    %v213 = vmul.f32 %v102, 0.5756463
    %v214 = vmul.f32 %v103, 0.5756463
    %v215 = vmul.f32 %v104, 0.5756463
    %v216 = vmul.f32 %v105, 0.5756463
    %v217 = vmul.f32 %v106, 0.5756463
    %v218 = vmul.f32 %v107, 0.5756463
    %v219 = vmul.f32 %v108, 0.5756463
    %v220 = vmul.f32 %v109, 0.5756463
    %v221 = vmul.f32 %v110, 0.5756463
    %v222 = vadd.f32 %v206, 21.874557
    %v223 = vadd.f32 %v207, 21.874557
    %v224 = vadd.f32 %v208, 21.874557
    %v225 = vadd.f32 %v209, 21.874557
    %v226 = vadd.f32 %v210, 21.874557
    %v227 = vadd.f32 %v211, 21.874557
    %v228 = vadd.f32 %v212, 21.874557
    %v229 = vadd.f32 %v213, 21.874557
    %v230 = vadd.f32 %v214, 21.874557
    %v231 = vadd.f32 %v215, 21.874557
    %v232 = vadd.f32 %v216, 21.874557
    %v233 = vadd.f32 %v217, 21.874557
    %v234 = vadd.f32 %v218, 21.874557
    %v235 = vadd.f32 %v219, 21.874557
    %v236 = vadd.f32 %v220, 21.874557
    %v237 = vadd.f32 %v221, 21.874557
    %v238 = vmul.f32 %v222, 1.442695
    %v239 = vpow.pop %v238
    %v240 = vmul.f32 %v223, 1.442695
    %v241 = vpow.pop %v240
    %v242 = vmul.f32 %v224, 1.442695
    %v243 = vpow.pop %v242
    %v244 = vmul.f32 %v225, 1.442695
    %v245 = vpow.pop %v244
    %v246 = vmul.f32 %v226, 1.442695
    %v247 = vpow.pop %v246
    %v248 = vmul.f32 %v227, 1.442695
    %v249 = vpow.pop %v248
    %v250 = vmul.f32 %v228, 1.442695
    %v251 = vpow.pop %v250
    %v252 = vmul.f32 %v229, 1.442695
    %v253 = vpow.pop %v252
    %v254 = vmul.f32 %v230, 1.442695
    %v255 = vpow.pop %v254
    %v256 = vmul.f32 %v231, 1.442695
    %v257 = vpow.pop %v256
    %v258 = vmul.f32 %v232, 1.442695
    %v259 = vpow.pop %v258
    %v260 = vmul.f32 %v233, 1.442695
    %v261 = vpow.pop %v260
    %v262 = vmul.f32 %v234, 1.442695
    %v263 = vpow.pop %v262
    %v264 = vmul.f32 %v235, 1.442695
    %v265 = vpow.pop %v264
    %v266 = vmul.f32 %v236, 1.442695
    %v267 = vpow.pop %v266
    %v268 = vmul.f32 %v237, 1.442695
    %v269 = vpow.pop %v268
    %v270 = vsub.f32 %v175, %v239
    %v271 = vsub.f32 %v177, %v241
    %v272 = vsub.f32 %v179, %v243
    %v273 = vsub.f32 %v181, %v245
    %v274 = vsub.f32 %v183, %v247
    %v275 = vsub.f32 %v185, %v249
    %v276 = vsub.f32 %v187, %v251
    %v277 = vsub.f32 %v189, %v253
    %v278 = vsub.f32 %v191, %v255
    %v279 = vsub.f32 %v193, %v257
    %v280 = vsub.f32 %v195, %v259
    %v281 = vsub.f32 %v197, %v261
    %v282 = vsub.f32 %v199, %v263
    %v283 = vsub.f32 %v201, %v265
    %v284 = vsub.f32 %v203, %v267
    %v285 = vsub.f32 %v205, %v269
    %v286 = vsub.f32 %v79, %v95
    %v287 = vsub.f32 %v80, %v96
    %v288 = vsub.f32 %v81, %v97
    %v289 = vsub.f32 %v82, %v98
    %v290 = vsub.f32 %v83, %v99
    %v291 = vsub.f32 %v84, %v100
    %v292 = vsub.f32 %v85, %v101
    %v293 = vsub.f32 %v86, %v102
    %v294 = vsub.f32 %v87, %v103
    %v295 = vsub.f32 %v88, %v104
    %v296 = vsub.f32 %v89, %v105
    %v297 = vsub.f32 %v90, %v106
    %v298 = vsub.f32 %v91, %v107
    %v299 = vsub.f32 %v92, %v108
    %v300 = vsub.f32 %v93, %v109
    %v301 = vsub.f32 %v94, %v110
    %v302 = vsel %vm141, %v270, %v286
    %v303 = vsel %vm141, %v271, %v287
    %v304 = vsel %vm141, %v272, %v288
    %v305 = vsel %vm141, %v273, %v289
    %v306 = vsel %vm141, %v274, %v290
    %v307 = vsel %vm141, %v275, %v291
    %v308 = vsel %vm141, %v276, %v292
    %v309 = vsel %vm141, %v277, %v293
    %v310 = vsel %vm141, %v278, %v294
    %v311 = vsel %vm141, %v279, %v295
    %v312 = vsel %vm141, %v280, %v296
    %v313 = vsel %vm141, %v281, %v297
    %v314 = vsel %vm141, %v282, %v298
    %v315 = vsel %vm141, %v283, %v299
    %v316 = vsel %vm141, %v284, %v300
    %v317 = vsel %vm141, %v285, %v301
    %v318 = vmul.f32 %v111, 2.3025851
    %v319 = vmul.f32 %v112, 2.3025851
    %v320 = vmul.f32 %v113, 2.3025851
    %v321 = vmul.f32 %v114, 2.3025851
    %v322 = vmul.f32 %v115, 2.3025851
    %v323 = vmul.f32 %v116, 2.3025851
    %v324 = vmul.f32 %v117, 2.3025851
    %v325 = vmul.f32 %v118, 2.3025851
    %v326 = vmul.f32 %v119, 2.3025851
    %v327 = vmul.f32 %v120, 2.3025851
    %v328 = vmul.f32 %v121, 2.3025851
    %v329 = vmul.f32 %v122, 2.3025851
    %v330 = vmul.f32 %v123, 2.3025851
    %v331 = vmul.f32 %v124, 2.3025851
    %v332 = vmul.f32 %v125, 2.3025851
    %v333 = vmul.f32 %v126, 2.3025851
    %v334 = vmul.f32 %v318, %v239
    %v335 = vmul.f32 %v319, %v241
    %v336 = vmul.f32 %v320, %v243
    %v337 = vmul.f32 %v321, %v245
    %v338 = vmul.f32 %v322, %v247
    %v339 = vmul.f32 %v323, %v249
    %v340 = vmul.f32 %v324, %v251
    %v341 = vmul.f32 %v325, %v253
    %v342 = vmul.f32 %v326, %v255
    %v343 = vmul.f32 %v327, %v257
    %v344 = vmul.f32 %v328, %v259
    %v345 = vmul.f32 %v329, %v261
    %v346 = vmul.f32 %v330, %v263
    %v347 = vmul.f32 %v331, %v265
    %v348 = vmul.f32 %v332, %v267
    %v349 = vmul.f32 %v333, %v269
    %v350 = vand.u32 2147483647, %v334
    %v351 = vand.u32 2147483647, %v335
    %v352 = vand.u32 2147483647, %v336
    %v353 = vand.u32 2147483647, %v337
    %v354 = vand.u32 2147483647, %v338
    %v355 = vand.u32 2147483647, %v339
    %v356 = vand.u32 2147483647, %v340
    %v357 = vand.u32 2147483647, %v341
    %v358 = vand.u32 2147483647, %v342
    %v359 = vand.u32 2147483647, %v343
    %v360 = vand.u32 2147483647, %v344
    %v361 = vand.u32 2147483647, %v345
    %v362 = vand.u32 2147483647, %v346
    %v363 = vand.u32 2147483647, %v347
    %v364 = vand.u32 2147483647, %v348
    %v365 = vand.u32 2147483647, %v349
    %v366 = vsel %vm141, %v350, %v111
    %v367 = vsel %vm141, %v351, %v112
    %v368 = vsel %vm141, %v352, %v113
    %v369 = vsel %vm141, %v353, %v114
    %v370 = vsel %vm141, %v354, %v115
    %v371 = vsel %vm141, %v355, %v116
    %v372 = vsel %vm141, %v356, %v117
    %v373 = vsel %vm141, %v357, %v118
    %v374 = vsel %vm141, %v358, %v119
    %v375 = vsel %vm141, %v359, %v120
    %v376 = vsel %vm141, %v360, %v121
    %v377 = vsel %vm141, %v361, %v122
    %v378 = vsel %vm141, %v362, %v123
    %v379 = vsel %vm141, %v363, %v124
    %v380 = vsel %vm141, %v364, %v125
    %v381 = vsel %vm141, %v365, %v126
    %v382 = vmul.f32 %v302, %v302
    %v383 = vmul.f32 %v303, %v303
    %v384 = vmul.f32 %v304, %v304
    %v385 = vmul.f32 %v305, %v305
    %v386 = vmul.f32 %v306, %v306
    %v387 = vmul.f32 %v307, %v307
    %v388 = vmul.f32 %v308, %v308
    %v389 = vmul.f32 %v309, %v309
    %v390 = vmul.f32 %v310, %v310
    %v391 = vmul.f32 %v311, %v311
    %v392 = vmul.f32 %v312, %v312
    %v393 = vmul.f32 %v313, %v313
    %v394 = vmul.f32 %v314, %v314
    %v395 = vmul.f32 %v315, %v315
    %v396 = vmul.f32 %v316, %v316
    %v397 = vmul.f32 %v317, %v317
    %v398 = vrcp.pop %v366
    %v399 = vrcp.pop %v367
    %v400 = vrcp.pop %v368
    %v401 = vrcp.pop %v369
    %v402 = vrcp.pop %v370
    %v403 = vrcp.pop %v371
    %v404 = vrcp.pop %v372
    %v405 = vrcp.pop %v373
    %v406 = vrcp.pop %v374
    %v407 = vrcp.pop %v375
    %v408 = vrcp.pop %v376
    %v409 = vrcp.pop %v377
    %v410 = vrcp.pop %v378
    %v411 = vrcp.pop %v379
    %v412 = vrcp.pop %v380
    %v413 = vrcp.pop %v381
    %v414 = vmul.f32 %v382, %v398
    %v415 = vmul.f32 %v383, %v399
    %v416 = vmul.f32 %v384, %v400
    %v417 = vmul.f32 %v385, %v401
    %v418 = vmul.f32 %v386, %v402
    %v419 = vmul.f32 %v387, %v403
    %v420 = vmul.f32 %v388, %v404
    %v421 = vmul.f32 %v389, %v405
    %v422 = vmul.f32 %v390, %v406
    %v423 = vmul.f32 %v391, %v407
    %v424 = vmul.f32 %v392, %v408
    %v425 = vmul.f32 %v393, %v409
    %v426 = vmul.f32 %v394, %v410
    %v427 = vmul.f32 %v395, %v411
    %v428 = vmul.f32 %v396, %v412
    %v429 = vmul.f32 %v397, %v413
    %v430 = vld [vmem:[#allocation2] sm:$0xff]
    %v431 = vadd.f32 %v414, %v415
    %v432 = vadd.f32 %v431, %v416
    %v433 = vadd.f32 %v432, %v417
    %v434 = vadd.f32 %v433, %v418
    %v435 = vadd.f32 %v434, %v419
    %v436 = vadd.f32 %v435, %v420
    %v437 = vadd.f32 %v436, %v421
    %v438 = vadd.f32 %v437, %v422
    %v439 = vadd.f32 %v438, %v423
    %v440 = vadd.f32 %v439, %v424
    %v441 = vadd.f32 %v440, %v425
    %v442 = vadd.f32 %v441, %v426
    %v443 = vadd.f32 %v442, %v427
    %v444 = vadd.f32 %v443, %v428
    %v445 = vadd.f32 %v444, %v429
    %v446 = vadd.f32 %v430, %v445
    %447 = vst [vmem:[#allocation2] sm:$0xff] %v446
    // Predicated region
    $region30: #{tpu_custom_call.1} parent=1 // pred_check
      %p448 = pneg %p74
    $region31: #{tpu_custom_call.1} parent=1 // pred_check_branch
      %450 = sbr.rel (%p448) target = $region33
    $region32: #{tpu_custom_call.1} parent=1 // pred_region
      %v451 = vld [vmem:[#allocation2] sm:$0xff]
      %452 = vadd.xlane.f32.xlu0 %v451
      %v453 = vpop.xlane.xlu0 %452
      %v454 = vrot.slane %v453, 4
      %v455 = vadd.f32 %v453, %v454
      %v456 = vrot.slane %v455, 2
      %v457 = vadd.f32 %v455, %v456
      %v458 = vrot.slane %v457, 1
      %v459 = vadd.f32 %v457, %v458
      %s460 = vtos %v459
      %v461 = vstv %s460
      %462 = vst [vmem:[#allocation9] sm:$0xff] %v461
    $region33: #{tpu_custom_call.1} parent=1 // pred_fallthru
      _
    // Predicated region
    $region34: #{tpu_custom_call.1} parent=1 // pred_check
      _
    $region35: #{tpu_custom_call.1} parent=1 // pred_check_branch
      %464 = sbr.rel (0) target = $region37
    $region36: #{tpu_custom_call.1} parent=1 // pred_region
      %s466 = ssub.s32 128, 128
      %467 = vsyncadd [#allocation5], %s466
      %s469 = sshll.u32 [#allocation9], 4
      %s470 = int_to_ptr.vmem [resolvable:$true] %s469
      %472 = dma.vmem_to_hbm [thread:$0]  %s470, 128, %s3, [#allocation5]
    $region37: #{tpu_custom_call.1} parent=1 // pred_fallthru
      _
    // Predicated region
    $region38: #{tpu_custom_call.1} parent=1 // pred_check
      _
    $region39: #{tpu_custom_call.1} parent=1 // pred_check_branch
      %474 = sbr.rel (0) target = $region41
    $region40: #{tpu_custom_call.1} parent=1 // pred_region
      %475 = dma.done [#allocation5], 128
    $region41: #{tpu_custom_call.1} parent=1 // pred_fallthru
      _
    %476 = vsyncpa [#allocation4], 1
    %477 = vsyncpa [#allocation7], 1
    %478 = vsyncpa [#allocation5], 1

</llo_original>
